<compile_context>
chip_gen: v7x
topology: tpu7x:2x2x1
jax: 0.10.0
libtpu: 0.0.40
codegen_flags: <defaults>
</compile_context>

<pallas_src>
import functools
import math

import jax
import jax.numpy as jnp
from jax.experimental import pallas as pl
from jax.experimental.pallas import tpu as pltpu


# --------------------------------------------------------------------------- #
# Kernels
# --------------------------------------------------------------------------- #
def _policy_value_kernel(x_ref, w1_ref, b1_ref,
                         w2p_ref, b2p_ref, w2v_ref, b2v_ref,
                         o_pi_ref, o_vf_ref):
    """Fused actor+critic tile.

    h      = relu(x @ [w1_pi | w1_vf] + [b1_pi ; b1_vf])      # (tm, 256), f32
    pi     = h[:, :128] @ w2_pi + b2_pi                        # (tm, n_pi)
    vf     = h[:, 128:] @ w2_vf + b2_vf                        # (tm, n_vf)
    """
    hid = w2p_ref.shape[0]  # 128

    # bf16 only at the MXU inputs; accumulate / bias / ReLU in f32 on the VPU.
    x = x_ref[...].astype(w1_ref.dtype)
    h = jnp.dot(x, w1_ref[...], preferred_element_type=jnp.float32) + b1_ref[...]
    h = jnp.maximum(h, 0.0)

    # Static, 128-lane-aligned slices of the hidden slab -> two small matmuls.
    h_pi = h[:, :hid].astype(w2p_ref.dtype)
    h_vf = h[:, hid:].astype(w2v_ref.dtype)

    pi = jnp.dot(h_pi, w2p_ref[...], preferred_element_type=jnp.float32) + b2p_ref[...]
    vf = jnp.dot(h_vf, w2v_ref[...], preferred_element_type=jnp.float32) + b2v_ref[...]

    o_pi_ref[...] = pi.astype(o_pi_ref.dtype)
    o_vf_ref[...] = vf.astype(o_vf_ref.dtype)


def _mlp2_kernel(x_ref, w1_ref, b1_ref, w2_ref, b2_ref, o_ref):
    """Single-head 2-layer MLP tile: o = relu(x @ w1 + b1) @ w2 + b2."""
    x = x_ref[...].astype(w1_ref.dtype)
    h = jnp.dot(x, w1_ref[...], preferred_element_type=jnp.float32) + b1_ref[...]
    h = jnp.maximum(h, 0.0)
    out = jnp.dot(h.astype(w2_ref.dtype), w2_ref[...],
                  preferred_element_type=jnp.float32) + b2_ref[...]
    o_ref[...] = out.astype(o_ref.dtype)


# --------------------------------------------------------------------------- #
# Tiling
# --------------------------------------------------------------------------- #
def _pick_batch_tile(batch, cap=1024):
    """Batch tile: multiple of 8, <= cap, and >= 2 grid steps when batch >= 16.

    The grid uses pl.cdiv(batch, tm); ragged last blocks are padded/masked by
    Pallas and the computation is row-wise independent, so no divisibility
    requirement and never a whole-array fallback.
    """
    if batch <= 8:
        return batch                      # one full block (block == array dim)
    half = (((batch + 1) // 2) + 7) // 8 * 8   # ceil(batch/2) rounded up to 8
    return max(8, min(cap, half))


# --------------------------------------------------------------------------- #
# pallas_call wrappers
# --------------------------------------------------------------------------- #
def policy_value_mlp(x, w1, b1, w2_pi, b2_pi, w2_vf, b2_vf,
                     out_dtype=jnp.float32):
    """One fused Pallas call producing (latent_pi, latent_vf).

    Weights/biases use full blocks with constant index_maps (resident across
    the batch grid); only activation / output tiles stream.
    """
    batch, feat = x.shape
    hid2 = w1.shape[1]          # 2 * hidden (256)
    hid = w2_pi.shape[0]        # hidden (128)
    n_pi = w2_pi.shape[1]
    n_vf = w2_vf.shape[1]

    b1_2d = b1.reshape(1, -1).astype(jnp.float32)
    b2p_2d = b2_pi.reshape(1, -1).astype(jnp.float32)
    b2v_2d = b2_vf.reshape(1, -1).astype(jnp.float32)

    tm = _pick_batch_tile(batch)
    grid = (pl.cdiv(batch, tm),)

    return pl.pallas_call(
        _policy_value_kernel,
        out_shape=(jax.ShapeDtypeStruct((batch, n_pi), out_dtype),
                   jax.ShapeDtypeStruct((batch, n_vf), out_dtype)),
        grid=grid,
        in_specs=[
            pl.BlockSpec((tm, feat), lambda i: (i, 0)),      # activations: tiled
            pl.BlockSpec((feat, hid2), lambda i: (0, 0)),    # w1 (cat): resident
            pl.BlockSpec((1, hid2), lambda i: (0, 0)),       # b1 (cat): resident
            pl.BlockSpec((hid, n_pi), lambda i: (0, 0)),     # w2 pi: resident
            pl.BlockSpec((1, n_pi), lambda i: (0, 0)),       # b2 pi: resident
            pl.BlockSpec((hid, n_vf), lambda i: (0, 0)),     # w2 vf: resident
            pl.BlockSpec((1, n_vf), lambda i: (0, 0)),       # b2 vf: resident
        ],
        out_specs=(pl.BlockSpec((tm, n_pi), lambda i: (i, 0)),
                   pl.BlockSpec((tm, n_vf), lambda i: (i, 0))),
        compiler_params=pltpu.CompilerParams(
            dimension_semantics=("parallel",)),
    )(x, w1, b1_2d, w2_pi, b2p_2d, w2_vf, b2v_2d)


def mlp2(x, w1, b1, w2, b2, out_dtype=jnp.float32):
    """Single-head two-layer MLP as one Pallas call, tiled over batch."""
    batch, feat = x.shape
    hid = w1.shape[1]
    out_dim = w2.shape[1]

    b1_2d = b1.reshape(1, -1).astype(jnp.float32)
    b2_2d = b2.reshape(1, -1).astype(jnp.float32)

    tm = _pick_batch_tile(batch)
    grid = (pl.cdiv(batch, tm),)

    return pl.pallas_call(
        _mlp2_kernel,
        out_shape=jax.ShapeDtypeStruct((batch, out_dim), out_dtype),
        grid=grid,
        in_specs=[
            pl.BlockSpec((tm, feat), lambda i: (i, 0)),
            pl.BlockSpec((feat, hid), lambda i: (0, 0)),
            pl.BlockSpec((1, hid), lambda i: (0, 0)),
            pl.BlockSpec((hid, out_dim), lambda i: (0, 0)),
            pl.BlockSpec((1, out_dim), lambda i: (0, 0)),
        ],
        out_specs=pl.BlockSpec((tm, out_dim), lambda i: (i, 0)),
        compiler_params=pltpu.CompilerParams(
            dimension_semantics=("parallel",)),
    )(x, w1, b1_2d, w2, b2_2d)


# --------------------------------------------------------------------------- #
# Module
# --------------------------------------------------------------------------- #
def _torch_linear_init(key, fan_in, fan_out, w_dtype=jnp.bfloat16):
    """nn.Linear default init U(-1/sqrt(in), 1/sqrt(in)); W stored as (in, out).

    Weights are cast to bf16 for the MXU (quantization vs. the f32 PyTorch
    model is the only fidelity difference); biases stay f32.
    """
    kw, kb = jax.random.split(key)
    bound = 1.0 / math.sqrt(fan_in)
    w = jax.random.uniform(kw, (fan_in, fan_out), jnp.float32,
                           minval=-bound, maxval=bound).astype(w_dtype)
    b = jax.random.uniform(kb, (fan_out,), jnp.float32,
                           minval=-bound, maxval=bound)
    return w, b


class CustomPolicyNetworkPallas:
    """JAX/Pallas port of CustomPolicyNetwork with fused actor/critic heads."""

    def __init__(self, feature_dim=64, last_layer_dim_pi=128, last_layer_dim_vf=128,
                 key=jax.random.PRNGKey(0), out_dtype=jnp.float32):
        self.hidden_dim = 128
        self.latent_dim_pi = last_layer_dim_pi
        self.latent_dim_vf = last_layer_dim_vf
        self.out_dtype = out_dtype

        k_p1, k_p2, k_v1, k_v2 = jax.random.split(key, 4)
        # policy_net params
        self.pw1, self.pb1 = _torch_linear_init(k_p1, feature_dim, self.hidden_dim)
        self.pw2, self.pb2 = _torch_linear_init(k_p2, self.hidden_dim, last_layer_dim_pi)
        # value_net params
        self.vw1, self.vb1 = _torch_linear_init(k_v1, feature_dim, self.hidden_dim)
        self.vw2, self.vb2 = _torch_linear_init(k_v2, self.hidden_dim, last_layer_dim_vf)

        # Fused layer-1 parameters (built once): [pw1 | vw1], [pb1 ; vb1].
        # Layer 2 stays as two separate (hidden, out) matrices — no block-diag.
        self.w1_cat = jnp.concatenate([self.pw1, self.vw1], axis=1)
        self.b1_cat = jnp.concatenate([self.pb1, self.vb1], axis=0)

    @functools.partial(jax.jit, static_argnums=0)
    def forward(self, features):
        """Single fused kernel call emitting both heads as separate outputs."""
        return policy_value_mlp(features, self.w1_cat, self.b1_cat,
                                self.pw2, self.pb2, self.vw2, self.vb2,
                                out_dtype=self.out_dtype)

    def forward_actor(self, features):
        return mlp2(features, self.pw1, self.pb1, self.pw2, self.pb2,
                    out_dtype=self.out_dtype)

    def forward_critic(self, features):
        return mlp2(features, self.vw1, self.vb1, self.vw2, self.vb2,
                    out_dtype=self.out_dtype)


# --------------------------------------------------------------------------- #
# Demo / self-test
# --------------------------------------------------------------------------- #
if __name__ == "__main__":
    key = jax.random.PRNGKey(0)
    k_feat, k_params = jax.random.split(key)

    batch, feature_dim = 8, 64
    features = jax.random.normal(k_feat, (batch, feature_dim), dtype=jnp.float32)

    net = CustomPolicyNetworkPallas(feature_dim=feature_dim,
                                    last_layer_dim_pi=128,
                                    last_layer_dim_vf=128,
                                    key=k_params)

    latent_pi, latent_vf = net.forward(features)
    jax.block_until_ready((latent_pi, latent_vf))

    # Reference in plain JAX, using the SAME bf16 weights / f32 accumulation.
    def ref_mlp(x, w1, b1, w2, b2):
        xb = x.astype(w1.dtype)
        h = jnp.dot(xb, w1, preferred_element_type=jnp.float32) + b1
        h = jnp.maximum(h, 0.0)
        return jnp.dot(h.astype(w2.dtype), w2,
                       preferred_element_type=jnp.float32) + b2

    ref_pi = ref_mlp(features, net.pw1, net.pb1, net.pw2, net.pb2)
    ref_vf = ref_mlp(features, net.vw1, net.vb1, net.vw2, net.vb2)

    assert latent_pi.shape == (batch, 128) and latent_vf.shape == (batch, 128)
    assert jnp.allclose(latent_pi, ref_pi, atol=1e-3, rtol=1e-3)
    assert jnp.allclose(latent_vf, ref_vf, atol=1e-3, rtol=1e-3)

    # Per-head kernels (forward_actor / forward_critic) also match.
    a = net.forward_actor(features)
    c = net.forward_critic(features)
    jax.block_until_ready((a, c))
    assert jnp.allclose(a, ref_pi, atol=1e-3, rtol=1e-3)
    assert jnp.allclose(c, ref_vf, atol=1e-3, rtol=1e-3)

    # Ragged / multi-step grid path (tile picker + cdiv grid, >=2 grid steps).
    batch2 = 20  # not a multiple of the 8-row tile -> masked last block
    feats2 = jax.random.normal(jax.random.PRNGKey(7), (batch2, feature_dim),
                               dtype=jnp.float32)
    pi2, vf2 = net.forward(feats2)
    jax.block_until_ready((pi2, vf2))
    ref_pi2 = ref_mlp(feats2, net.pw1, net.pb1, net.pw2, net.pb2)
    ref_vf2 = ref_mlp(feats2, net.vw1, net.vb1, net.vw2, net.vb2)
    assert jnp.allclose(pi2, ref_pi2, atol=1e-3, rtol=1e-3)
    assert jnp.allclose(vf2, ref_vf2, atol=1e-3, rtol=1e-3)

    print("KERNEL_OK")
</pallas_src>

<mosaic_0001>
module attributes {stable_mosaic.version = 11 : i64} {
  func.func @_policy_value_kernel(%arg0: i32, %arg1: memref<8x64xf32, #tpu.memory_space<vmem>>, %arg2: memref<64x256xbf16, #tpu.memory_space<vmem>>, %arg3: memref<1x256xf32, #tpu.memory_space<vmem>>, %arg4: memref<128x128xbf16, #tpu.memory_space<vmem>>, %arg5: memref<1x128xf32, #tpu.memory_space<vmem>>, %arg6: memref<128x128xbf16, #tpu.memory_space<vmem>>, %arg7: memref<1x128xf32, #tpu.memory_space<vmem>>, %arg8: memref<8x128xf32, #tpu.memory_space<vmem>>, %arg9: memref<8x128xf32, #tpu.memory_space<vmem>>) attributes {dimension_semantics = [#tpu.dimension_semantics<parallel>], iteration_bounds = array<i64: 1>, scalar_prefetch = 0 : i64, scratch_operands = 0 : i64, tpu.core_type = #tpu.core_type<tc>, window_params = [{transform_indices = @transform_0, window_bounds = array<i64: 8, 64>}, {pipeline_mode = #tpu.pipeline_mode<synchronous>, transform_indices = @transform_1, window_bounds = array<i64: 64, 256>}, {pipeline_mode = #tpu.pipeline_mode<synchronous>, transform_indices = @transform_2, window_bounds = array<i64: 1, 256>}, {pipeline_mode = #tpu.pipeline_mode<synchronous>, transform_indices = @transform_3, window_bounds = array<i64: 128, 128>}, {pipeline_mode = #tpu.pipeline_mode<synchronous>, transform_indices = @transform_4, window_bounds = array<i64: 1, 128>}, {pipeline_mode = #tpu.pipeline_mode<synchronous>, transform_indices = @transform_5, window_bounds = array<i64: 128, 128>}, {pipeline_mode = #tpu.pipeline_mode<synchronous>, transform_indices = @transform_6, window_bounds = array<i64: 1, 128>}, {transform_indices = @transform_7, window_bounds = array<i64: 8, 128>}, {transform_indices = @transform_8, window_bounds = array<i64: 8, 128>}]} {
    %c0 = arith.constant 0 : index
    %c0_0 = arith.constant 0 : index
    %0 = vector.load %arg1[%c0, %c0_0] : memref<8x64xf32, #tpu.memory_space<vmem>>, vector<8x64xf32>
    %1 = arith.truncf %0 : vector<8x64xf32> to vector<8x64xbf16>
    %c0_1 = arith.constant 0 : index
    %c0_2 = arith.constant 0 : index
    %2 = vector.load %arg2[%c0_1, %c0_2] : memref<64x256xbf16, #tpu.memory_space<vmem>>, vector<64x256xbf16>
    %cst = arith.constant dense<0.000000e+00> : vector<8x256xf32>
    %3 = tpu.matmul %1, %2, %cst {dimension_numbers = #tpu.dot_dimension_numbers<[1], [0], [0], [1], [0, 0, 1, 1], [], []>} : vector<8x64xbf16>, vector<64x256xbf16>, vector<8x256xf32> -> vector<8x256xf32>
    %c0_3 = arith.constant 0 : index
    %c0_4 = arith.constant 0 : index
    %4 = vector.load %arg3[%c0_3, %c0_4] : memref<1x256xf32, #tpu.memory_space<vmem>>, vector<1x256xf32>
    %5 = vector.broadcast %4 : vector<1x256xf32> to vector<8x256xf32>
    %6 = arith.addf %3, %5 : vector<8x256xf32>
    %cst_5 = arith.constant 0.000000e+00 : f32
    %7 = vector.broadcast %cst_5 : f32 to vector<8x256xf32>
    %8 = arith.maximumf %6, %7 : vector<8x256xf32>
    %9 = vector.extract_strided_slice %8 {offsets = [0, 0], sizes = [8, 128], strides = [1, 1]} : vector<8x256xf32> to vector<8x128xf32>
    %10 = arith.truncf %9 : vector<8x128xf32> to vector<8x128xbf16>
    %11 = vector.extract_strided_slice %8 {offsets = [0, 128], sizes = [8, 128], strides = [1, 1]} : vector<8x256xf32> to vector<8x128xf32>
    %12 = arith.truncf %11 : vector<8x128xf32> to vector<8x128xbf16>
    %c0_6 = arith.constant 0 : index
    %c0_7 = arith.constant 0 : index
    %13 = vector.load %arg4[%c0_6, %c0_7] : memref<128x128xbf16, #tpu.memory_space<vmem>>, vector<128x128xbf16>
    %cst_8 = arith.constant dense<0.000000e+00> : vector<8x128xf32>
    %14 = tpu.matmul %10, %13, %cst_8 {dimension_numbers = #tpu.dot_dimension_numbers<[1], [0], [0], [1], [0, 0, 1, 1], [], []>} : vector<8x128xbf16>, vector<128x128xbf16>, vector<8x128xf32> -> vector<8x128xf32>
    %c0_9 = arith.constant 0 : index
    %c0_10 = arith.constant 0 : index
    %15 = vector.load %arg5[%c0_9, %c0_10] : memref<1x128xf32, #tpu.memory_space<vmem>>, vector<1x128xf32>
    %16 = vector.broadcast %15 : vector<1x128xf32> to vector<8x128xf32>
    %17 = arith.addf %14, %16 : vector<8x128xf32>
    %c0_11 = arith.constant 0 : index
    %c0_12 = arith.constant 0 : index
    %18 = vector.load %arg6[%c0_11, %c0_12] : memref<128x128xbf16, #tpu.memory_space<vmem>>, vector<128x128xbf16>
    %cst_13 = arith.constant dense<0.000000e+00> : vector<8x128xf32>
    %19 = tpu.matmul %12, %18, %cst_13 {dimension_numbers = #tpu.dot_dimension_numbers<[1], [0], [0], [1], [0, 0, 1, 1], [], []>} : vector<8x128xbf16>, vector<128x128xbf16>, vector<8x128xf32> -> vector<8x128xf32>
    %c0_14 = arith.constant 0 : index
    %c0_15 = arith.constant 0 : index
    %20 = vector.load %arg7[%c0_14, %c0_15] : memref<1x128xf32, #tpu.memory_space<vmem>>, vector<1x128xf32>
    %21 = vector.broadcast %20 : vector<1x128xf32> to vector<8x128xf32>
    %22 = arith.addf %19, %21 : vector<8x128xf32>
    %c0_16 = arith.constant 0 : index
    %c0_17 = arith.constant 0 : index
    %23 = vector.load %arg8[%c0_16, %c0_17] : memref<8x128xf32, #tpu.memory_space<vmem>>, vector<8x128xf32>
    tpu.vector_store %arg8[%c0_16, %c0_17], %17 {strides = array<i32>} : memref<8x128xf32, #tpu.memory_space<vmem>>, vector<8x128xf32>,
    %c0_18 = arith.constant 0 : index
    %c0_19 = arith.constant 0 : index
    %24 = vector.load %arg9[%c0_18, %c0_19] : memref<8x128xf32, #tpu.memory_space<vmem>>, vector<8x128xf32>
    tpu.vector_store %arg9[%c0_18, %c0_19], %22 {strides = array<i32>} : memref<8x128xf32, #tpu.memory_space<vmem>>, vector<8x128xf32>,
    return
  }
  func.func @transform_0(%arg0: i32) -> (i32, i32) {
    %c0_i32 = arith.constant 0 : i32
    %c0_i32_0 = arith.constant 0 : i32
    return %arg0, %c0_i32 : i32, i32
  }
  func.func @transform_1(%arg0: i32) -> (i32, i32) {
    %c0_i32 = arith.constant 0 : i32
    %c0_i32_0 = arith.constant 0 : i32
    %c0_i32_1 = arith.constant 0 : i32
    return %c0_i32, %c0_i32_0 : i32, i32
  }
  func.func @transform_2(%arg0: i32) -> (i32, i32) {
    %c0_i32 = arith.constant 0 : i32
    %c0_i32_0 = arith.constant 0 : i32
    %c0_i32_1 = arith.constant 0 : i32
    return %c0_i32, %c0_i32_0 : i32, i32
  }
  func.func @transform_3(%arg0: i32) -> (i32, i32) {
    %c0_i32 = arith.constant 0 : i32
    %c0_i32_0 = arith.constant 0 : i32
    %c0_i32_1 = arith.constant 0 : i32
    return %c0_i32, %c0_i32_0 : i32, i32
  }
  func.func @transform_4(%arg0: i32) -> (i32, i32) {
    %c0_i32 = arith.constant 0 : i32
    %c0_i32_0 = arith.constant 0 : i32
    %c0_i32_1 = arith.constant 0 : i32
    return %c0_i32, %c0_i32_0 : i32, i32
  }
  func.func @transform_5(%arg0: i32) -> (i32, i32) {
    %c0_i32 = arith.constant 0 : i32
    %c0_i32_0 = arith.constant 0 : i32
    %c0_i32_1 = arith.constant 0 : i32
    return %c0_i32, %c0_i32_0 : i32, i32
  }
  func.func @transform_6(%arg0: i32) -> (i32, i32) {
    %c0_i32 = arith.constant 0 : i32
    %c0_i32_0 = arith.constant 0 : i32
    %c0_i32_1 = arith.constant 0 : i32
    return %c0_i32, %c0_i32_0 : i32, i32
  }
  func.func @transform_7(%arg0: i32) -> (i32, i32) {
    %c0_i32 = arith.constant 0 : i32
    %c0_i32_0 = arith.constant 0 : i32
    return %arg0, %c0_i32 : i32, i32
  }
  func.func @transform_8(%arg0: i32) -> (i32, i32) {
    %c0_i32 = arith.constant 0 : i32
    %c0_i32_0 = arith.constant 0 : i32
    return %arg0, %c0_i32 : i32, i32
  }
}

</mosaic_0001>

<llo_original>
// kernel: forward.1
$region0: #{forward.1}
  #allocation0 [shape = 'u32[]', space=smem, size = 0x4, offset = 0x4, fixed_abs, tag = 'smem constant byte address 0x4 - core index']
  #allocation1 [shape = 'u32[144,128]{1,0:T(1,128)}', space=vmem, size = 0x12000, scoped, tag = 'internal scratch']
  %s0 = inlined_call_operand.hbm [shape: f32[8,64], index: 0, kind: input, shape index: {}]
  %s1 = inlined_call_operand.vmem [shape: bf16[64,256], index: 1, kind: input, shape index: {}]
  %s2 = inlined_call_operand.vmem [shape: f32[1,256], index: 2, kind: input, shape index: {}]
  %s3 = inlined_call_operand.vmem [shape: bf16[128,128], index: 3, kind: input, shape index: {}]
  %s4 = inlined_call_operand.vmem [shape: f32[1,128], index: 4, kind: input, shape index: {}]
  %s5 = inlined_call_operand.vmem [shape: bf16[128,128], index: 5, kind: input, shape index: {}]
  %s6 = inlined_call_operand.vmem [shape: f32[1,128], index: 6, kind: input, shape index: {}]
  %s7 = inlined_call_operand.hbm [shape: f32[8,128], index: 7, kind: output, shape index: {0}]
  %s8 = inlined_call_operand.hbm [shape: f32[8,128], index: 8, kind: output, shape index: {1}]
  %9 = xla_tuple %s7, %s8
  %s10 = sld [smem:[#allocation0]]
  $region50: #{forward.1} parent=0
    _
  %s12 = ssub.s32 1, %s10
  %s13 = scalar_select 0, %s12, %s10
  $region1: #{forward.1} parent=0
    #allocation2 [shape = 'u8[4096]{0}', space=vmem, size = 0x1000, scoped, tag = 'input window, operand 0, single buffered']
    #allocation3 [shape = 's32[1]{0}', space=sflag, size = 0x4, scoped, tag = 'scoped memory for forward.1']
    #allocation4 [shape = 's32[1]{0}', space=sflag, size = 0x4, scoped, tag = 'scoped memory for forward.1']
    #allocation5 [shape = 'u8[4096]{0}', space=vmem, size = 0x1000, scoped, tag = 'output window, operand 0, single buffered']
    #allocation6 [shape = 'u8[4096]{0}', space=vmem, size = 0x1000, scoped, tag = 'output window, operand 1, single buffered']
    #allocation7 [shape = 's32[1]{0}', space=sflag, size = 0x4, scoped, tag = 'scoped memory for forward.1']
    %14 = vsyncpa [#allocation3], 0
    %15 = vsyncpa [#allocation4], 0
    %16 = vsyncpa [#allocation7], 0
    // Predicated region
    $region2: #{forward.1} parent=1 // pred_check
      _
    $region3: #{forward.1} parent=1 // pred_check_branch
      %18 = sbr.rel (0) target = $region5
    $region4: #{forward.1} parent=1 // pred_region
      %s20 = ssub.s32 128, 128
      %21 = vsyncadd [#allocation3], %s20
      %s23 = sshll.u32 [#allocation2], 4
      %s24 = int_to_ptr.vmem [resolvable:$true] %s23
      %26 = dma.hbm_to_vmem [thread:$0]  %s0, 128, %s24, [#allocation3]
    $region5: #{forward.1} parent=1 // pred_fallthru
      _
    // Predicated region
    $region6: #{forward.1} parent=1 // pred_check
      _
    $region7: #{forward.1} parent=1 // pred_check_branch
      %28 = sbr.rel (0) target = $region9
    $region8: #{forward.1} parent=1 // pred_region
      _
    $region9: #{forward.1} parent=1 // pred_fallthru
      _
    // Predicated region
    $region10: #{forward.1} parent=1 // pred_check
      _
    $region11: #{forward.1} parent=1 // pred_check_branch
      %30 = sbr.rel (0) target = $region13
    $region12: #{forward.1} parent=1 // pred_region
      _
    $region13: #{forward.1} parent=1 // pred_fallthru
      _
    // Predicated region
    $region14: #{forward.1} parent=1 // pred_check
      _
    $region15: #{forward.1} parent=1 // pred_check_branch
      %32 = sbr.rel (0) target = $region17
    $region16: #{forward.1} parent=1 // pred_region
      _
    $region17: #{forward.1} parent=1 // pred_fallthru
      _
    // Predicated region
    $region18: #{forward.1} parent=1 // pred_check
      _
    $region19: #{forward.1} parent=1 // pred_check_branch
      %34 = sbr.rel (0) target = $region21
    $region20: #{forward.1} parent=1 // pred_region
      _
    $region21: #{forward.1} parent=1 // pred_fallthru
      _
    // Predicated region
    $region22: #{forward.1} parent=1 // pred_check
      _
    $region23: #{forward.1} parent=1 // pred_check_branch
      %36 = sbr.rel (0) target = $region25
    $region24: #{forward.1} parent=1 // pred_region
      _
    $region25: #{forward.1} parent=1 // pred_fallthru
      _
    // Predicated region
    $region26: #{forward.1} parent=1 // pred_check
      _
    $region27: #{forward.1} parent=1 // pred_check_branch
      %38 = sbr.rel (0) target = $region29
    $region28: #{forward.1} parent=1 // pred_region
      _
    $region29: #{forward.1} parent=1 // pred_fallthru
      _
    // Predicated region
    $region30: #{forward.1} parent=1 // pred_check
      _
    $region31: #{forward.1} parent=1 // pred_check_branch
      %40 = sbr.rel (0) target = $region33
    $region32: #{forward.1} parent=1 // pred_region
      %41 = dma.done [#allocation3], 128
    $region33: #{forward.1} parent=1 // pred_fallthru
      _
    %v43 = vld [vmem:[#allocation2] sm:$0xff]
    %v44 = vpack.c.bf16 %v43, %v43
    %v45 = vld [vmem:[%s1] sm:$0xff]
    %v46 = vld [vmem:[%s1 + $0x8] sm:$0xff]
    %v47 = vld [vmem:[%s1 + $0x10] sm:$0xff]
    %v48 = vld [vmem:[%s1 + $0x18] sm:$0xff]
    %v49 = vld [vmem:[%s1 + $0x20] sm:$0xff]
    %v50 = vld [vmem:[%s1 + $0x28] sm:$0xff]
    %v51 = vld [vmem:[%s1 + $0x30] sm:$0xff]
    %v52 = vld [vmem:[%s1 + $0x38] sm:$0xff]
    %v53 = vld [vmem:[%s2] sm:$0x3]
    %v55 = vlaneseq
    %v56 = vshrl.u32 %v55, 7
    %v57 = vsub.s32 0, %v56
    %v58 = vrot.slane %v53, %v57
    %v59 = vlaneseq
    %v60 = vshrl.u32 %v59, 7
    %v61 = vsub.s32 1, %v60
    %v62 = vrot.slane %v53, %v61
    %v73 = vunpack.c.l.b16 %v45
    %v74 = vunpack.c.h.b16 %v45
    %v75 = vunpack.c.l.b16 %v46
    %v76 = vunpack.c.h.b16 %v46
    %v77 = vunpack.c.l.b16 %v47
    %v78 = vunpack.c.h.b16 %v47
    %v79 = vunpack.c.l.b16 %v48
    %v80 = vunpack.c.h.b16 %v48
    %v81 = vunpack.c.l.b16 %v49
    %v82 = vunpack.c.h.b16 %v49
    %v83 = vunpack.c.l.b16 %v50
    %v84 = vunpack.c.h.b16 %v50
    %v85 = vunpack.c.l.b16 %v51
    %v86 = vunpack.c.h.b16 %v51
    %v87 = vunpack.c.l.b16 %v52
    %v88 = vunpack.c.h.b16 %v52
    %v89 = vpack.c.b16 %v75, %v73
    %v90 = vpack.c.b16 %v76, %v74
    %v91 = vpack.c.b16 %v79, %v77
    %v92 = vpack.c.b16 %v80, %v78
    %v93 = vpack.c.b16 %v83, %v81
    %v94 = vpack.c.b16 %v84, %v82
    %v95 = vpack.c.b16 %v87, %v85
    %v96 = vpack.c.b16 %v88, %v86
    %vm105 = vcmask 523264
    %v107 = vsel %vm105, %v44, 0
    %109 = vmatprep.subr.bf16.mxu0 %v90
    %110 = vmatpush1.bf16.msra.mxu0 %v89
    %111 = vmatprep.subr.bf16.mxu0 %v92
    %112 = vmatpush1.bf16.msra.mxu0 %v91
    %113 = vmatprep.subr.bf16.mxu0 %v94
    %114 = vmatpush1.bf16.msra.mxu0 %v93
    %115 = vmatprep.subr.bf16.mxu0 %v96
    %116 = vmatpush1.bf16.msra.mxu0 %v95
    %117 = vmatprep.subr.bf16.mxu0 0
    %118 = vmatpush1.bf16.msra.mxu0 0
    %119 = vmatprep.subr.bf16.mxu0 0
    %120 = vmatpush1.bf16.msra.mxu0 0
    %121 = vmatprep.subr.bf16.mxu0 0
    %122 = vmatpush1.bf16.msra.mxu0 0
    %123 = vmatprep.subr.bf16.mxu0 0
    %124 = vmatpush1.bf16.msra.mxu0 0
    %125 = vmatprep.subr.bf16.mxu0 0
    %126 = vmatpush1.bf16.msra.mxu0 0
    %127 = vmatprep.subr.bf16.mxu0 0
    %128 = vmatpush1.bf16.msra.mxu0 0
    %129 = vmatprep.subr.bf16.mxu0 0
    %130 = vmatpush1.bf16.msra.mxu0 0
    %131 = vmatprep.subr.bf16.mxu0 0
    %132 = vmatpush1.bf16.msra.mxu0 0
    %133 = vmatprep.subr.bf16.mxu0 0
    %134 = vmatpush1.bf16.msra.mxu0 0
    %135 = vmatprep.subr.bf16.mxu0 0
    %136 = vmatpush1.bf16.msra.mxu0 0
    %137 = vmatprep.subr.bf16.mxu0 0
    %138 = vmatpush1.bf16.msra.mxu0 0
    %139 = vmatprep.subr.bf16.mxu0 0
    %140 = vmatpush1.bf16.msra.mxu0 0
    %141 = vmatprep.mubr.bf16.mxu0 0
    %142 = vmatmul.mubr.bf16.gmra.mrb[0].mxu0 %v107
    %v143 = vpop.f32.mrb[0].mxu0
    %v144 = vadd.f32 %v58, %v143
    %v145 = vpop.f32.mrb[0].mxu0
    %v146 = vadd.f32 %v62, %v145
    %v147 = vpop.f32.mrb[0].mxu0
    %v148 = vpop.f32.mrb[0].mxu0
    %149 = vdwg.mxu0
    %v150 = vmax.f32 %v144, 0.0
    %v151 = vmax.f32 %v146, 0.0
    %v152 = vpack.c.bf16 %v150, %v150
    %v153 = vpack.c.bf16 %v151, %v151
    %v154 = vld [vmem:[%s3] sm:$0xf]
    %v155 = vld [vmem:[%s3 + $0x4] sm:$0xf]
    %v156 = vld [vmem:[%s3 + $0x8] sm:$0xf]
    %v157 = vld [vmem:[%s3 + $0xc] sm:$0xf]
    %v158 = vld [vmem:[%s3 + $0x10] sm:$0xf]
    %v159 = vld [vmem:[%s3 + $0x14] sm:$0xf]
    %v160 = vld [vmem:[%s3 + $0x18] sm:$0xf]
    %v161 = vld [vmem:[%s3 + $0x1c] sm:$0xf]
    %v162 = vld [vmem:[%s3 + $0x20] sm:$0xf]
    %v163 = vld [vmem:[%s3 + $0x24] sm:$0xf]
    %v164 = vld [vmem:[%s3 + $0x28] sm:$0xf]
    %v165 = vld [vmem:[%s3 + $0x2c] sm:$0xf]
    %v166 = vld [vmem:[%s3 + $0x30] sm:$0xf]
    %v167 = vld [vmem:[%s3 + $0x34] sm:$0xf]
    %v168 = vld [vmem:[%s3 + $0x38] sm:$0xf]
    %v169 = vld [vmem:[%s3 + $0x3c] sm:$0xf]
    %v170 = vld [vmem:[%s4] sm:$0x1]
    %v172 = vlaneseq
    %v173 = vshrl.u32 %v172, 7
    %v174 = vsub.s32 0, %v173
    %v175 = vrot.slane %v170, %v174
    %v193 = vunpack.c.l.b16 %v154
    %v194 = vunpack.c.l.b16 %v155
    %v195 = vunpack.c.l.b16 %v156
    %v196 = vunpack.c.l.b16 %v157
    %v197 = vunpack.c.l.b16 %v158
    %v198 = vunpack.c.l.b16 %v159
    %v199 = vunpack.c.l.b16 %v160
    %v200 = vunpack.c.l.b16 %v161
    %v201 = vunpack.c.l.b16 %v162
    %v202 = vunpack.c.l.b16 %v163
    %v203 = vunpack.c.l.b16 %v164
    %v204 = vunpack.c.l.b16 %v165
    %v205 = vunpack.c.l.b16 %v166
    %v206 = vunpack.c.l.b16 %v167
    %v207 = vunpack.c.l.b16 %v168
    %v208 = vunpack.c.l.b16 %v169
    %v209 = vpack.c.b16 %v194, %v193
    %v210 = vpack.c.b16 %v196, %v195
    %v211 = vpack.c.b16 %v198, %v197
    %v212 = vpack.c.b16 %v200, %v199
    %v213 = vpack.c.b16 %v202, %v201
    %v214 = vpack.c.b16 %v204, %v203
    %v215 = vpack.c.b16 %v206, %v205
    %v216 = vpack.c.b16 %v208, %v207
    %225 = vmatprep.subr.bf16.mxu0 0
    %226 = vmatpush1.bf16.msra.mxu0 %v209
    %227 = vmatprep.subr.bf16.mxu0 0
    %228 = vmatpush1.bf16.msra.mxu0 %v210
    %229 = vmatprep.subr.bf16.mxu0 0
    %230 = vmatpush1.bf16.msra.mxu0 %v211
    %231 = vmatprep.subr.bf16.mxu0 0
    %232 = vmatpush1.bf16.msra.mxu0 %v212
    %233 = vmatprep.subr.bf16.mxu0 0
    %234 = vmatpush1.bf16.msra.mxu0 %v213
    %235 = vmatprep.subr.bf16.mxu0 0
    %236 = vmatpush1.bf16.msra.mxu0 %v214
    %237 = vmatprep.subr.bf16.mxu0 0
    %238 = vmatpush1.bf16.msra.mxu0 %v215
    %239 = vmatprep.subr.bf16.mxu0 0
    %240 = vmatpush1.bf16.msra.mxu0 %v216
    %241 = vmatprep.subr.bf16.mxu0 0
    %242 = vmatpush1.bf16.msra.mxu0 0
    %243 = vmatprep.subr.bf16.mxu0 0
    %244 = vmatpush1.bf16.msra.mxu0 0
    %245 = vmatprep.subr.bf16.mxu0 0
    %246 = vmatpush1.bf16.msra.mxu0 0
    %247 = vmatprep.subr.bf16.mxu0 0
    %248 = vmatpush1.bf16.msra.mxu0 0
    %249 = vmatprep.subr.bf16.mxu0 0
    %250 = vmatpush1.bf16.msra.mxu0 0
    %251 = vmatprep.subr.bf16.mxu0 0
    %252 = vmatpush1.bf16.msra.mxu0 0
    %253 = vmatprep.subr.bf16.mxu0 0
    %254 = vmatpush1.bf16.msra.mxu0 0
    %255 = vmatprep.subr.bf16.mxu0 0
    %256 = vmatpush1.bf16.msra.mxu0 0
    %257 = vmatprep.mubr.bf16.mxu0 0
    %258 = vmatmul.mubr.bf16.gmra.mrb[0].mxu0 %v152
    %v259 = vpop.f32.mrb[0].mxu0
    %v260 = vadd.f32 %v175, %v259
    %v261 = vpop.f32.mrb[0].mxu0
    %v262 = vpop.f32.mrb[0].mxu0
    %v263 = vpop.f32.mrb[0].mxu0
    %264 = vdwg.mxu0
    %v265 = vld [vmem:[%s5] sm:$0xf]
    %v266 = vld [vmem:[%s5 + $0x4] sm:$0xf]
    %v267 = vld [vmem:[%s5 + $0x8] sm:$0xf]
    %v268 = vld [vmem:[%s5 + $0xc] sm:$0xf]
    %v269 = vld [vmem:[%s5 + $0x10] sm:$0xf]
    %v270 = vld [vmem:[%s5 + $0x14] sm:$0xf]
    %v271 = vld [vmem:[%s5 + $0x18] sm:$0xf]
    %v272 = vld [vmem:[%s5 + $0x1c] sm:$0xf]
    %v273 = vld [vmem:[%s5 + $0x20] sm:$0xf]
    %v274 = vld [vmem:[%s5 + $0x24] sm:$0xf]
    %v275 = vld [vmem:[%s5 + $0x28] sm:$0xf]
    %v276 = vld [vmem:[%s5 + $0x2c] sm:$0xf]
    %v277 = vld [vmem:[%s5 + $0x30] sm:$0xf]
    %v278 = vld [vmem:[%s5 + $0x34] sm:$0xf]
    %v279 = vld [vmem:[%s5 + $0x38] sm:$0xf]
    %v280 = vld [vmem:[%s5 + $0x3c] sm:$0xf]
    %v281 = vld [vmem:[%s6] sm:$0x1]
    %v283 = vlaneseq
    %v284 = vshrl.u32 %v283, 7
    %v285 = vsub.s32 0, %v284
    %v286 = vrot.slane %v281, %v285
    %v304 = vunpack.c.l.b16 %v265
    %v305 = vunpack.c.l.b16 %v266
    %v306 = vunpack.c.l.b16 %v267
    %v307 = vunpack.c.l.b16 %v268
    %v308 = vunpack.c.l.b16 %v269
    %v309 = vunpack.c.l.b16 %v270
    %v310 = vunpack.c.l.b16 %v271
    %v311 = vunpack.c.l.b16 %v272
    %v312 = vunpack.c.l.b16 %v273
    %v313 = vunpack.c.l.b16 %v274
    %v314 = vunpack.c.l.b16 %v275
    %v315 = vunpack.c.l.b16 %v276
    %v316 = vunpack.c.l.b16 %v277
    %v317 = vunpack.c.l.b16 %v278
    %v318 = vunpack.c.l.b16 %v279
    %v319 = vunpack.c.l.b16 %v280
    %v320 = vpack.c.b16 %v305, %v304
    %v321 = vpack.c.b16 %v307, %v306
    %v322 = vpack.c.b16 %v309, %v308
    %v323 = vpack.c.b16 %v311, %v310
    %v324 = vpack.c.b16 %v313, %v312
    %v325 = vpack.c.b16 %v315, %v314
    %v326 = vpack.c.b16 %v317, %v316
    %v327 = vpack.c.b16 %v319, %v318
    %336 = vmatprep.subr.bf16.mxu0 0
    %337 = vmatpush1.bf16.msra.mxu0 %v320
    %338 = vmatprep.subr.bf16.mxu0 0
    %339 = vmatpush1.bf16.msra.mxu0 %v321
    %340 = vmatprep.subr.bf16.mxu0 0
    %341 = vmatpush1.bf16.msra.mxu0 %v322
    %342 = vmatprep.subr.bf16.mxu0 0
    %343 = vmatpush1.bf16.msra.mxu0 %v323
    %344 = vmatprep.subr.bf16.mxu0 0
    %345 = vmatpush1.bf16.msra.mxu0 %v324
    %346 = vmatprep.subr.bf16.mxu0 0
    %347 = vmatpush1.bf16.msra.mxu0 %v325
    %348 = vmatprep.subr.bf16.mxu0 0
    %349 = vmatpush1.bf16.msra.mxu0 %v326
    %350 = vmatprep.subr.bf16.mxu0 0
    %351 = vmatpush1.bf16.msra.mxu0 %v327
    %352 = vmatprep.subr.bf16.mxu0 0
    %353 = vmatpush1.bf16.msra.mxu0 0
    %354 = vmatprep.subr.bf16.mxu0 0
    %355 = vmatpush1.bf16.msra.mxu0 0
    %356 = vmatprep.subr.bf16.mxu0 0
    %357 = vmatpush1.bf16.msra.mxu0 0
    %358 = vmatprep.subr.bf16.mxu0 0
    %359 = vmatpush1.bf16.msra.mxu0 0
    %360 = vmatprep.subr.bf16.mxu0 0
    %361 = vmatpush1.bf16.msra.mxu0 0
    %362 = vmatprep.subr.bf16.mxu0 0
    %363 = vmatpush1.bf16.msra.mxu0 0
    %364 = vmatprep.subr.bf16.mxu0 0
    %365 = vmatpush1.bf16.msra.mxu0 0
    %366 = vmatprep.subr.bf16.mxu0 0
    %367 = vmatpush1.bf16.msra.mxu0 0
    %368 = vmatprep.mubr.bf16.mxu0 0
    %369 = vmatmul.mubr.bf16.gmra.mrb[0].mxu0 %v153
    %v370 = vpop.f32.mrb[0].mxu0
    %v371 = vadd.f32 %v286, %v370
    %v372 = vpop.f32.mrb[0].mxu0
    %v373 = vpop.f32.mrb[0].mxu0
    %v374 = vpop.f32.mrb[0].mxu0
    %375 = vdwg.mxu0
    %376 = vst [vmem:[#allocation5] sm:$0xff] %v260
    %377 = vst [vmem:[#allocation6] sm:$0xff] %v371
    // Predicated region
    $region34: #{forward.1} parent=1 // pred_check
      _
    $region35: #{forward.1} parent=1 // pred_check_branch
      %379 = sbr.rel (0) target = $region37
    $region36: #{forward.1} parent=1 // pred_region
      %s381 = ssub.s32 128, 128
      %382 = vsyncadd [#allocation4], %s381
      %s384 = sshll.u32 [#allocation5], 4
      %s385 = int_to_ptr.vmem [resolvable:$true] %s384
      %387 = dma.vmem_to_hbm [thread:$0]  %s385, 128, %s7, [#allocation4]
    $region37: #{forward.1} parent=1 // pred_fallthru
      _
    // Predicated region
    $region38: #{forward.1} parent=1 // pred_check
      _
    $region39: #{forward.1} parent=1 // pred_check_branch
      %389 = sbr.rel (0) target = $region41
    $region40: #{forward.1} parent=1 // pred_region
      %s391 = ssub.s32 128, 128
      %392 = vsyncadd [#allocation7], %s391
      %s394 = sshll.u32 [#allocation6], 4
      %s395 = int_to_ptr.vmem [resolvable:$true] %s394
      %397 = dma.vmem_to_hbm [thread:$0]  %s395, 128, %s8, [#allocation7]
    $region41: #{forward.1} parent=1 // pred_fallthru
      _
    // Predicated region
    $region42: #{forward.1} parent=1 // pred_check
      _
    $region43: #{forward.1} parent=1 // pred_check_branch
      %399 = sbr.rel (0) target = $region45
    $region44: #{forward.1} parent=1 // pred_region
      %400 = dma.done [#allocation4], 128
    $region45: #{forward.1} parent=1 // pred_fallthru
      _
    // Predicated region
    $region46: #{forward.1} parent=1 // pred_check
      _
    $region47: #{forward.1} parent=1 // pred_check_branch
      %402 = sbr.rel (0) target = $region49
    $region48: #{forward.1} parent=1 // pred_region
      %403 = dma.done [#allocation7], 128
    $region49: #{forward.1} parent=1 // pred_fallthru
      _
    %404 = vsyncpa [#allocation3], 1
    %405 = vsyncpa [#allocation4], 1
    %406 = vsyncpa [#allocation7], 1

</llo_original>
